<compile_context>
chip_gen: v7x
topology: tpu7x:2x2x1
jax: 0.10.0
libtpu: 0.0.40
codegen_flags: <defaults>
</compile_context>

<pallas_src>
import functools

import jax
import jax.numpy as jnp
from jax.experimental import pallas as pl
from jax.experimental.pallas import tpu as pltpu


def _round_up(x, m):
    return ((x + m - 1) // m) * m


def _num_tensorcores():
    # Trace-time hardware query; only used as a grid-sizing heuristic, so any
    # failure safely falls back to 1 TensorCore (v5e/v6e behaviour).
    try:
        info = pltpu.get_tpu_info()
        for attr in ("tensorcores_per_chip", "num_tensorcores", "num_cores",
                     "cores_per_chip", "core_count"):
            n = getattr(info, attr, None)
            if isinstance(n, int) and n > 0:
                return n
    except Exception:
        pass
    return 1


def _cnn_maxpool_kernel(x_ref, w_ref, b_ref, o_ref, *, l_out):
    # x_ref: (TB, S_pad, W*D)   im2col'd input windows for TB batch elements
    # w_ref: (W*D, C_pad)       conv weight with the window folded into K
    # b_ref: (1, C_pad)         conv bias (padded)
    # o_ref: (TB, C_pad)        max over conv positions
    tb, s_pad, wd = x_ref.shape
    c_pad = o_ref.shape[-1]
    rows = tb * s_pad

    # Collapse (TB, S_pad) -> rows so the MXU sees one big M dimension.
    # S_pad is a multiple of 8, so this reshape is sublane-tile aligned.
    x2 = x_ref[...].reshape(rows, wd)

    # Single MXU matmul: K = W*D (one systolic pass), N = C_pad (one 128-wide
    # result tile).  No post-matmul window combine needed.
    y = jnp.dot(x2, w_ref[...], preferred_element_type=jnp.float32)   # (rows, C_pad)

    # Validity mask: conv position t = r % S_pad must be < l_out.  Padded
    # sequence positions (zero-filled in the wrapper) would otherwise win the
    # max when every valid output is negative.  Cheap (rows, 1) compare.
    r_idx = jax.lax.broadcasted_iota(jnp.int32, (rows, 1), 0)
    valid = jax.lax.rem(r_idx, s_pad) < l_out
    y = jnp.where(valid, y, -jnp.inf)

    pooled = jnp.max(y.reshape(tb, s_pad, c_pad), axis=1)             # (TB, C_pad)

    # Bias is constant over the pooled axis, so add it after the max.
    o_ref[...] = (pooled + b_ref[...]).astype(o_ref.dtype)


def cnn_maxpool(x, conv_weight, conv_bias, *, tb=None):
    """x: (B, S, D); conv_weight: (C, W, D) (PyTorch (C,1,W,D) squeezed); conv_bias: (C,)."""
    B, S, D = x.shape
    C, W, Dw = conv_weight.shape
    assert Dw == D, "conv kernel must span the full word_dim"
    assert W <= S, "window_size must not exceed seq_len"
    l_out = S - W + 1

    s_pad = _round_up(S, 8)        # sublane-dense sequence tiles
    c_pad = _round_up(C, 128)      # lane-dense channel axis (unmasked stores)
    wd = W * D

    if tb is None:
        n_tc = _num_tensorcores()
        # Balanced batch split across TensorCores: grid=(1,) on 1-TC v5e/v6e,
        # two balanced steps on 2-TC v7x.  TB multiple of 8 (sublane-dense).
        tb = _round_up(pl.cdiv(B, max(1, n_tc)), 8)
        # VMEM budget per step: double-buffered x block (last dim lane-padded
        # to 128 in VMEM), the (rows, C_pad) f32 matmul output, and the
        # double-buffered (TB, C_pad) output.  Cap at ~24 MiB so the same tile
        # choice fits v7x's 64 MiB physical / 32 MiB scoped VMEM.
        lane_wd = _round_up(wd, 128)
        bytes_per_batch_row = 4 * (s_pad * (2 * lane_wd + c_pad) + 2 * c_pad)
        max_tb = max(8, (24 * 1024 * 1024 // bytes_per_batch_row) // 8 * 8)
        tb = min(tb, max_tb)
    b_pad = _round_up(B, tb)
    grid = (b_pad // tb,)

    # im2col in the wrapper: x_win[b, t, w*D + d] = x[b, t+w, d].  This folds
    # the window axis into the matmul K dimension.  NOTE: reads x W times from
    # HBM — fine at these S*D sizes, re-check if x grows large.
    x_p = jnp.pad(x, ((0, b_pad - B), (0, s_pad + W - 1 - S), (0, 0)))
    x_win = jnp.concatenate([x_p[:, w:w + s_pad, :] for w in range(W)], axis=-1)

    # Weight folded the same way: row index = w*D + d, lane index = channel.
    w_fold = jnp.transpose(conv_weight, (1, 2, 0)).reshape(wd, C)      # (W*D, C)
    w_fold = jnp.pad(w_fold, ((0, 0), (0, c_pad - C)))
    b_p = jnp.pad(conv_bias, (0, c_pad - C)).reshape(1, c_pad)

    kernel = functools.partial(_cnn_maxpool_kernel, l_out=l_out)

    out = pl.pallas_call(
        kernel,
        out_shape=jax.ShapeDtypeStruct((b_pad, c_pad), x.dtype),
        grid_spec=pltpu.PrefetchScalarGridSpec(
            num_scalar_prefetch=0,
            grid=grid,
            in_specs=[
                pl.BlockSpec((tb, s_pad, wd), lambda b: (b, 0, 0)),
                pl.BlockSpec((wd, c_pad), lambda b: (0, 0)),   # VMEM-resident
                pl.BlockSpec((1, c_pad), lambda b: (0, 0)),    # VMEM-resident
            ],
            out_specs=pl.BlockSpec((tb, c_pad), lambda b: (b, 0)),
        ),
        compiler_params=pltpu.CompilerParams(
            # TODO(synk): on v7x verify "parallel" shards the 2-step grid across
            # both TensorCores; switch to pltpu.CORE_PARALLEL if it does not.
            dimension_semantics=("parallel",)),
    )(x_win, w_fold, b_p)

    # Padded batch rows / channels carry finite garbage (0 + bias); this slice
    # removes them — do not drop it.
    return out[:B, :C]


def cnn_maxpool_reference(x, conv_weight, conv_bias):
    # Pure-JAX reference of the PyTorch forward (valid conv over full word_dim
    # + max over positions).
    B, S, D = x.shape
    C, W, _ = conv_weight.shape
    L = S - W + 1
    windows = jnp.stack([x[:, t:t + W, :] for t in range(L)], axis=1)  # (B,L,W,D)
    y = jnp.einsum("blwd,cwd->blc", windows, conv_weight,
                   precision=jax.lax.Precision.HIGHEST)
    y = y + conv_bias[None, None, :]
    return jnp.max(y, axis=1)  # (B, C)


if __name__ == "__main__":
    # Shapes from Chapter_3/3.2.2_NLU.py: x = torch.randn(30, 5, 10),
    # window_size = 3, out_channels = 15.
    B, S, D = 30, 5, 10
    W, C = 3, 15

    key = jax.random.PRNGKey(0)
    kx, kw, kb = jax.random.split(key, 3)

    x = jax.random.normal(kx, (B, S, D), dtype=jnp.float32)

    # Deterministic Conv2d(1, C, (W, D)) parameter init (uniform, PyTorch-style bound).
    fan_in = 1 * W * D
    bound = 1.0 / (fan_in ** 0.5)
    conv_weight = jax.random.uniform(kw, (C, W, D), minval=-bound, maxval=bound,
                                     dtype=jnp.float32)
    conv_bias = jax.random.uniform(kb, (C,), minval=-bound, maxval=bound,
                                   dtype=jnp.float32)

    out = cnn_maxpool(x, conv_weight, conv_bias)
    out = jax.block_until_ready(out)

    ref = cnn_maxpool_reference(x, conv_weight, conv_bias)
    assert out.shape == (B, C)
    assert jnp.allclose(out, ref, atol=1e-5, rtol=1e-5), "mismatch vs reference"

    print("KERNEL_OK")
</pallas_src>

<mosaic_0001>
module attributes {stable_mosaic.version = 11 : i64} {
  func.func @_cnn_maxpool_kernel(%arg0: i32, %arg1: memref<32x8x30xf32, #tpu.memory_space<vmem>>, %arg2: memref<30x128xf32, #tpu.memory_space<vmem>>, %arg3: memref<1x128xf32, #tpu.memory_space<vmem>>, %arg4: memref<32x128xf32, #tpu.memory_space<vmem>>) attributes {dimension_semantics = [#tpu.dimension_semantics<parallel>], iteration_bounds = array<i64: 1>, scalar_prefetch = 0 : i64, scratch_operands = 0 : i64, tpu.core_type = #tpu.core_type<tc>, window_params = [{transform_indices = @transform_0, window_bounds = array<i64: 32, 8, 30>}, {pipeline_mode = #tpu.pipeline_mode<synchronous>, transform_indices = @transform_1, window_bounds = array<i64: 30, 128>}, {pipeline_mode = #tpu.pipeline_mode<synchronous>, transform_indices = @transform_2, window_bounds = array<i64: 1, 128>}, {transform_indices = @transform_3, window_bounds = array<i64: 32, 128>}]} {
    %c0 = arith.constant 0 : index
    %c0_0 = arith.constant 0 : index
    %c0_1 = arith.constant 0 : index
    %0 = vector.load %arg1[%c0, %c0_0, %c0_1] : memref<32x8x30xf32, #tpu.memory_space<vmem>>, vector<32x8x30xf32>
    %1 = vector.shape_cast %0 : vector<32x8x30xf32> to vector<256x30xf32>
    %c0_2 = arith.constant 0 : index
    %c0_3 = arith.constant 0 : index
    %2 = vector.load %arg2[%c0_2, %c0_3] : memref<30x128xf32, #tpu.memory_space<vmem>>, vector<30x128xf32>
    %cst = arith.constant dense<0.000000e+00> : vector<256x128xf32>
    %3 = tpu.matmul %1, %2, %cst {dimension_numbers = #tpu.dot_dimension_numbers<[1], [0], [0], [1], [0, 0, 1, 1], [], []>} : vector<256x30xf32>, vector<30x128xf32>, vector<256x128xf32> -> vector<256x128xf32>
    %4 = tpu.iota {dimensions = array<i32: 0>} : vector<256x1xi32>
    %c8_i32 = arith.constant 8 : i32
    %5 = vector.broadcast %c8_i32 : i32 to vector<256x1xi32>
    %6 = arith.remsi %4, %5 : vector<256x1xi32>
    %c3_i32 = arith.constant 3 : i32
    %7 = vector.broadcast %c3_i32 : i32 to vector<256x1xi32>
    %8 = arith.cmpi slt, %6, %7 : vector<256x1xi32>
    %cst_4 = arith.constant 0xFF800000 : f32
    %9 = vector.shape_cast %8 : vector<256x1xi1> to vector<256x1xi1>
    %10 = vector.broadcast %9 : vector<256x1xi1> to vector<256x128xi1>
    %11 = vector.broadcast %cst_4 : f32 to vector<256x128xf32>
    %12 = arith.select %10, %3, %11 : vector<256x128xi1>, vector<256x128xf32>
    %13 = vector.shape_cast %12 : vector<256x128xf32> to vector<32x8x128xf32>
    %cst_5 = arith.constant dense<0xFF800000> : vector<32x128xf32>
    %14 = vector.multi_reduction <maximumf>, %13, %cst_5 [1] : vector<32x8x128xf32> to vector<32x128xf32>
    %c0_6 = arith.constant 0 : index
    %c0_7 = arith.constant 0 : index
    %15 = vector.load %arg3[%c0_6, %c0_7] : memref<1x128xf32, #tpu.memory_space<vmem>>, vector<1x128xf32>
    %16 = vector.broadcast %15 : vector<1x128xf32> to vector<32x128xf32>
    %17 = arith.addf %14, %16 : vector<32x128xf32>
    %c0_8 = arith.constant 0 : index
    %c0_9 = arith.constant 0 : index
    %18 = vector.load %arg4[%c0_8, %c0_9] : memref<32x128xf32, #tpu.memory_space<vmem>>, vector<32x128xf32>
    tpu.vector_store %arg4[%c0_8, %c0_9], %17 {strides = array<i32>} : memref<32x128xf32, #tpu.memory_space<vmem>>, vector<32x128xf32>,
    return
  }
  func.func @transform_0(%arg0: i32) -> (i32, i32, i32) {
    %c0_i32 = arith.constant 0 : i32
    %c0_i32_0 = arith.constant 0 : i32
    %c0_i32_1 = arith.constant 0 : i32
    return %arg0, %c0_i32, %c0_i32_0 : i32, i32, i32
  }
  func.func @transform_1(%arg0: i32) -> (i32, i32) {
    %c0_i32 = arith.constant 0 : i32
    %c0_i32_0 = arith.constant 0 : i32
    %c0_i32_1 = arith.constant 0 : i32
    return %c0_i32, %c0_i32_0 : i32, i32
  }
  func.func @transform_2(%arg0: i32) -> (i32, i32) {
    %c0_i32 = arith.constant 0 : i32
    %c0_i32_0 = arith.constant 0 : i32
    %c0_i32_1 = arith.constant 0 : i32
    return %c0_i32, %c0_i32_0 : i32, i32
  }
  func.func @transform_3(%arg0: i32) -> (i32, i32) {
    %c0_i32 = arith.constant 0 : i32
    %c0_i32_0 = arith.constant 0 : i32
    return %arg0, %c0_i32 : i32, i32
  }
}

</mosaic_0001>

<llo_original>
// kernel: tpu_custom_call.1
$region0: #{tpu_custom_call.1}
  #allocation0 [shape = 'u32[]', space=smem, size = 0x4, offset = 0x4, fixed_abs, tag = 'smem constant byte address 0x4 - core index']
  #allocation1 [shape = 'u32[144,128]{1,0:T(1,128)}', space=vmem, size = 0x12000, scoped, tag = 'internal scratch']
  %s0 = inlined_call_operand.vmem [shape: f32[32,8,30], index: 0, kind: input, shape index: {}]
  %s1 = inlined_call_operand.vmem [shape: f32[30,128], index: 1, kind: input, shape index: {}]
  %s2 = inlined_call_operand.vmem [shape: f32[1,128], index: 2, kind: input, shape index: {}]
  %s3 = inlined_call_operand.hbm [shape: f32[32,128], index: 3, kind: output, shape index: {}]
  %s4 = sld [smem:[#allocation0]]
  $region22: #{tpu_custom_call.1} parent=0
    _
  %s6 = ssub.s32 1, %s4
  %s7 = scalar_select 0, %s6, %s4
  $region1: #{tpu_custom_call.1} parent=0
    #allocation2 [shape = 'u8[16384]{0}', space=vmem, size = 0x4000, scoped, tag = 'output window, operand 0, single buffered']
    #allocation3 [shape = 's32[1]{0}', space=sflag, size = 0x4, scoped, tag = 'scoped memory for tpu_custom_call.1']
    %8 = vsyncpa [#allocation3], 0
    // Predicated region
    $region2: #{tpu_custom_call.1} parent=1 // pred_check
      _
    $region3: #{tpu_custom_call.1} parent=1 // pred_check_branch
      %10 = sbr.rel (0) target = $region5
    $region4: #{tpu_custom_call.1} parent=1 // pred_region
      _
    $region5: #{tpu_custom_call.1} parent=1 // pred_fallthru
      _
    // Predicated region
    $region6: #{tpu_custom_call.1} parent=1 // pred_check
      _
    $region7: #{tpu_custom_call.1} parent=1 // pred_check_branch
      %12 = sbr.rel (0) target = $region9
    $region8: #{tpu_custom_call.1} parent=1 // pred_region
      _
    $region9: #{tpu_custom_call.1} parent=1 // pred_fallthru
      _
    // Predicated region
    $region10: #{tpu_custom_call.1} parent=1 // pred_check
      _
    $region11: #{tpu_custom_call.1} parent=1 // pred_check_branch
      %14 = sbr.rel (0) target = $region13
    $region12: #{tpu_custom_call.1} parent=1 // pred_region
      _
    $region13: #{tpu_custom_call.1} parent=1 // pred_fallthru
      _
    %v15 = vld [vmem:[%s0] sm:$0xff]
    %v16 = vld [vmem:[%s0 + $0x8] sm:$0xff]
    %v17 = vld [vmem:[%s0 + $0x10] sm:$0xff]
    %v18 = vld [vmem:[%s0 + $0x18] sm:$0xff]
    %v19 = vld [vmem:[%s0 + $0x20] sm:$0xff]
    %v20 = vld [vmem:[%s0 + $0x28] sm:$0xff]
    %v21 = vld [vmem:[%s0 + $0x30] sm:$0xff]
    %v22 = vld [vmem:[%s0 + $0x38] sm:$0xff]
    %v23 = vld [vmem:[%s0 + $0x40] sm:$0xff]
    %v24 = vld [vmem:[%s0 + $0x48] sm:$0xff]
    %v25 = vld [vmem:[%s0 + $0x50] sm:$0xff]
    %v26 = vld [vmem:[%s0 + $0x58] sm:$0xff]
    %v27 = vld [vmem:[%s0 + $0x60] sm:$0xff]
    %v28 = vld [vmem:[%s0 + $0x68] sm:$0xff]
    %v29 = vld [vmem:[%s0 + $0x70] sm:$0xff]
    %v30 = vld [vmem:[%s0 + $0x78] sm:$0xff]
    %v31 = vld [vmem:[%s0 + $0x80] sm:$0xff]
    %v32 = vld [vmem:[%s0 + $0x88] sm:$0xff]
    %v33 = vld [vmem:[%s0 + $0x90] sm:$0xff]
    %v34 = vld [vmem:[%s0 + $0x98] sm:$0xff]
    %v35 = vld [vmem:[%s0 + $0xa0] sm:$0xff]
    %v36 = vld [vmem:[%s0 + $0xa8] sm:$0xff]
    %v37 = vld [vmem:[%s0 + $0xb0] sm:$0xff]
    %v38 = vld [vmem:[%s0 + $0xb8] sm:$0xff]
    %v39 = vld [vmem:[%s0 + $0xc0] sm:$0xff]
    %v40 = vld [vmem:[%s0 + $0xc8] sm:$0xff]
    %v41 = vld [vmem:[%s0 + $0xd0] sm:$0xff]
    %v42 = vld [vmem:[%s0 + $0xd8] sm:$0xff]
    %v43 = vld [vmem:[%s0 + $0xe0] sm:$0xff]
    %v44 = vld [vmem:[%s0 + $0xe8] sm:$0xff]
    %v45 = vld [vmem:[%s0 + $0xf0] sm:$0xff]
    %v46 = vld [vmem:[%s0 + $0xf8] sm:$0xff]
    %v47 = vld [vmem:[%s1] sm:$0xff]
    %v48 = vld [vmem:[%s1 + $0x8] sm:$0xff]
    %v49 = vld [vmem:[%s1 + $0x10] sm:$0xff]
    %v50 = vld [vmem:[%s1 + $0x18] sm:$0x3f]
    %vm51 = vcmask 244736
    %v53 = vsel %vm51, %v15, 0
    %v56 = vsel %vm51, %v16, 0
    %v59 = vsel %vm51, %v17, 0
    %v62 = vsel %vm51, %v18, 0
    %v65 = vsel %vm51, %v19, 0
    %v68 = vsel %vm51, %v20, 0
    %v71 = vsel %vm51, %v21, 0
    %v74 = vsel %vm51, %v22, 0
    %v77 = vsel %vm51, %v23, 0
    %v80 = vsel %vm51, %v24, 0
    %v83 = vsel %vm51, %v25, 0
    %v86 = vsel %vm51, %v26, 0
    %v89 = vsel %vm51, %v27, 0
    %v92 = vsel %vm51, %v28, 0
    %v95 = vsel %vm51, %v29, 0
    %v98 = vsel %vm51, %v30, 0
    %v101 = vsel %vm51, %v31, 0
    %v104 = vsel %vm51, %v32, 0
    %v107 = vsel %vm51, %v33, 0
    %v110 = vsel %vm51, %v34, 0
    %v113 = vsel %vm51, %v35, 0
    %v116 = vsel %vm51, %v36, 0
    %v119 = vsel %vm51, %v37, 0
    %v122 = vsel %vm51, %v38, 0
    %v125 = vsel %vm51, %v39, 0
    %v128 = vsel %vm51, %v40, 0
    %v131 = vsel %vm51, %v41, 0
    %v134 = vsel %vm51, %v42, 0
    %v137 = vsel %vm51, %v43, 0
    %v140 = vsel %vm51, %v44, 0
    %v143 = vsel %vm51, %v45, 0
    %v146 = vsel %vm51, %v46, 0
    %vm148 = vcmask 1045504
    %v150 = vsel %vm148, %v50, 0
    %152 = vmatprep.subr.mxu0 0.0
    %153 = vmatpush1.msra.mxu0 %v47
    %154 = vmatprep.subr.mxu0 0.0
    %155 = vmatpush1.msra.mxu0 %v48
    %156 = vmatprep.subr.mxu0 0.0
    %157 = vmatpush1.msra.mxu0 %v49
    %158 = vmatprep.subr.mxu0 0.0
    %159 = vmatpush1.msra.mxu0 %v150
    %160 = vmatprep.subr.mxu0 0.0
    %161 = vmatpush1.msra.mxu0 0.0
    %162 = vmatprep.subr.mxu0 0.0
    %163 = vmatpush1.msra.mxu0 0.0
    %164 = vmatprep.subr.mxu0 0.0
    %165 = vmatpush1.msra.mxu0 0.0
    %166 = vmatprep.subr.mxu0 0.0
    %167 = vmatpush1.msra.mxu0 0.0
    %168 = vmatprep.subr.mxu0 0.0
    %169 = vmatpush1.msra.mxu0 0.0
    %170 = vmatprep.subr.mxu0 0.0
    %171 = vmatpush1.msra.mxu0 0.0
    %172 = vmatprep.subr.mxu0 0.0
    %173 = vmatpush1.msra.mxu0 0.0
    %174 = vmatprep.subr.mxu0 0.0
    %175 = vmatpush1.msra.mxu0 0.0
    %176 = vmatprep.subr.mxu0 0.0
    %177 = vmatpush1.msra.mxu0 0.0
    %178 = vmatprep.subr.mxu0 0.0
    %179 = vmatpush1.msra.mxu0 0.0
    %180 = vmatprep.subr.mxu0 0.0
    %181 = vmatpush1.msra.mxu0 0.0
    %182 = vmatprep.subr.mxu0 0.0
    %183 = vmatpush1.msra.mxu0 0.0
    %184 = vmatprep.subr.mxu0 0.0
    %185 = vmatpush1.msra.mxu0 0.0
    %186 = vmatprep.subr.mxu0 0.0
    %187 = vmatpush1.msra.mxu0 0.0
    %188 = vmatprep.subr.mxu0 0.0
    %189 = vmatpush1.msra.mxu0 0.0
    %190 = vmatprep.subr.mxu0 0.0
    %191 = vmatpush1.msra.mxu0 0.0
    %192 = vmatprep.subr.mxu0 0.0
    %193 = vmatpush1.msra.mxu0 0.0
    %194 = vmatprep.subr.mxu0 0.0
    %195 = vmatpush1.msra.mxu0 0.0
    %196 = vmatprep.subr.mxu0 0.0
    %197 = vmatpush1.msra.mxu0 0.0
    %198 = vmatprep.subr.mxu0 0.0
    %199 = vmatpush1.msra.mxu0 0.0
    %200 = vmatprep.subr.mxu0 0.0
    %201 = vmatpush1.msra.mxu0 0.0
    %202 = vmatprep.subr.mxu0 0.0
    %203 = vmatpush1.msra.mxu0 0.0
    %204 = vmatprep.subr.mxu0 0.0
    %205 = vmatpush1.msra.mxu0 0.0
    %206 = vmatprep.subr.mxu0 0.0
    %207 = vmatpush1.msra.mxu0 0.0
    %208 = vmatprep.subr.mxu0 0.0
    %209 = vmatpush1.msra.mxu0 0.0
    %210 = vmatprep.subr.mxu0 0.0
    %211 = vmatpush1.msra.mxu0 0.0
    %212 = vmatprep.subr.mxu0 0.0
    %213 = vmatpush1.msra.mxu0 0.0
    %214 = vmatprep.subr.mxu0 0.0
    %215 = vmatpush1.msra.mxu0 0.0
    %216 = vmatprep.mubr.f32.mxu0 0.0
    %217 = vmatmul.mubr.f32.gmra.mrb[0].mxu0 %v53
    %v218 = vpop.f32.mrb[0].mxu0
    %v219 = vadd.f32 0.0, %v218
    %v220 = vpop.f32.mrb[0].mxu0
    %221 = vmatprep.mubr.f32.mxu0 0.0
    %222 = vmatmul.mubr.f32.gmra.mrb[0].mxu0 %v56
    %v223 = vpop.f32.mrb[0].mxu0
    %v224 = vadd.f32 0.0, %v223
    %v225 = vpop.f32.mrb[0].mxu0
    %226 = vmatprep.mubr.f32.mxu0 0.0
    %227 = vmatmul.mubr.f32.gmra.mrb[0].mxu0 %v59
    %v228 = vpop.f32.mrb[0].mxu0
    %v229 = vadd.f32 0.0, %v228
    %v230 = vpop.f32.mrb[0].mxu0
    %231 = vmatprep.mubr.f32.mxu0 0.0
    %232 = vmatmul.mubr.f32.gmra.mrb[0].mxu0 %v62
    %v233 = vpop.f32.mrb[0].mxu0
    %v234 = vadd.f32 0.0, %v233
    %v235 = vpop.f32.mrb[0].mxu0
    %236 = vmatprep.mubr.f32.mxu0 0.0
    %237 = vmatmul.mubr.f32.gmra.mrb[0].mxu0 %v65
    %v238 = vpop.f32.mrb[0].mxu0
    %v239 = vadd.f32 0.0, %v238
    %v240 = vpop.f32.mrb[0].mxu0
    %241 = vmatprep.mubr.f32.mxu0 0.0
    %242 = vmatmul.mubr.f32.gmra.mrb[0].mxu0 %v68
    %v243 = vpop.f32.mrb[0].mxu0
    %v244 = vadd.f32 0.0, %v243
    %v245 = vpop.f32.mrb[0].mxu0
    %246 = vmatprep.mubr.f32.mxu0 0.0
    %247 = vmatmul.mubr.f32.gmra.mrb[0].mxu0 %v71
    %v248 = vpop.f32.mrb[0].mxu0
    %v249 = vadd.f32 0.0, %v248
    %v250 = vpop.f32.mrb[0].mxu0
    %251 = vmatprep.mubr.f32.mxu0 0.0
    %252 = vmatmul.mubr.f32.gmra.mrb[0].mxu0 %v74
    %v253 = vpop.f32.mrb[0].mxu0
    %v254 = vadd.f32 0.0, %v253
    %v255 = vpop.f32.mrb[0].mxu0
    %256 = vmatprep.mubr.f32.mxu0 0.0
    %257 = vmatmul.mubr.f32.gmra.mrb[0].mxu0 %v77
    %v258 = vpop.f32.mrb[0].mxu0
    %v259 = vadd.f32 0.0, %v258
    %v260 = vpop.f32.mrb[0].mxu0
    %261 = vmatprep.mubr.f32.mxu0 0.0
    %262 = vmatmul.mubr.f32.gmra.mrb[0].mxu0 %v80
    %v263 = vpop.f32.mrb[0].mxu0
    %v264 = vadd.f32 0.0, %v263
    %v265 = vpop.f32.mrb[0].mxu0
    %266 = vmatprep.mubr.f32.mxu0 0.0
    %267 = vmatmul.mubr.f32.gmra.mrb[0].mxu0 %v83
    %v268 = vpop.f32.mrb[0].mxu0
    %v269 = vadd.f32 0.0, %v268
    %v270 = vpop.f32.mrb[0].mxu0
    %271 = vmatprep.mubr.f32.mxu0 0.0
    %272 = vmatmul.mubr.f32.gmra.mrb[0].mxu0 %v86
    %v273 = vpop.f32.mrb[0].mxu0
    %v274 = vadd.f32 0.0, %v273
    %v275 = vpop.f32.mrb[0].mxu0
    %276 = vmatprep.mubr.f32.mxu0 0.0
    %277 = vmatmul.mubr.f32.gmra.mrb[0].mxu0 %v89
    %v278 = vpop.f32.mrb[0].mxu0
    %v279 = vadd.f32 0.0, %v278
    %v280 = vpop.f32.mrb[0].mxu0
    %281 = vmatprep.mubr.f32.mxu0 0.0
    %282 = vmatmul.mubr.f32.gmra.mrb[0].mxu0 %v92
    %v283 = vpop.f32.mrb[0].mxu0
    %v284 = vadd.f32 0.0, %v283
    %v285 = vpop.f32.mrb[0].mxu0
    %286 = vmatprep.mubr.f32.mxu0 0.0
    %287 = vmatmul.mubr.f32.gmra.mrb[0].mxu0 %v95
    %v288 = vpop.f32.mrb[0].mxu0
    %v289 = vadd.f32 0.0, %v288
    %v290 = vpop.f32.mrb[0].mxu0
    %291 = vmatprep.mubr.f32.mxu0 0.0
    %292 = vmatmul.mubr.f32.gmra.mrb[0].mxu0 %v98
    %v293 = vpop.f32.mrb[0].mxu0
    %v294 = vadd.f32 0.0, %v293
    %v295 = vpop.f32.mrb[0].mxu0
    %296 = vmatprep.mubr.f32.mxu0 0.0
    %297 = vmatmul.mubr.f32.gmra.mrb[0].mxu0 %v101
    %v298 = vpop.f32.mrb[0].mxu0
    %v299 = vadd.f32 0.0, %v298
    %v300 = vpop.f32.mrb[0].mxu0
    %301 = vmatprep.mubr.f32.mxu0 0.0
    %302 = vmatmul.mubr.f32.gmra.mrb[0].mxu0 %v104
    %v303 = vpop.f32.mrb[0].mxu0
    %v304 = vadd.f32 0.0, %v303
    %v305 = vpop.f32.mrb[0].mxu0
    %306 = vmatprep.mubr.f32.mxu0 0.0
    %307 = vmatmul.mubr.f32.gmra.mrb[0].mxu0 %v107
    %v308 = vpop.f32.mrb[0].mxu0
    %v309 = vadd.f32 0.0, %v308
    %v310 = vpop.f32.mrb[0].mxu0
    %311 = vmatprep.mubr.f32.mxu0 0.0
    %312 = vmatmul.mubr.f32.gmra.mrb[0].mxu0 %v110
    %v313 = vpop.f32.mrb[0].mxu0
    %v314 = vadd.f32 0.0, %v313
    %v315 = vpop.f32.mrb[0].mxu0
    %316 = vmatprep.mubr.f32.mxu0 0.0
    %317 = vmatmul.mubr.f32.gmra.mrb[0].mxu0 %v113
    %v318 = vpop.f32.mrb[0].mxu0
    %v319 = vadd.f32 0.0, %v318
    %v320 = vpop.f32.mrb[0].mxu0
    %321 = vmatprep.mubr.f32.mxu0 0.0
    %322 = vmatmul.mubr.f32.gmra.mrb[0].mxu0 %v116
    %v323 = vpop.f32.mrb[0].mxu0
    %v324 = vadd.f32 0.0, %v323
    %v325 = vpop.f32.mrb[0].mxu0
    %326 = vmatprep.mubr.f32.mxu0 0.0
    %327 = vmatmul.mubr.f32.gmra.mrb[0].mxu0 %v119
    %v328 = vpop.f32.mrb[0].mxu0
    %v329 = vadd.f32 0.0, %v328
    %v330 = vpop.f32.mrb[0].mxu0
    %331 = vmatprep.mubr.f32.mxu0 0.0
    %332 = vmatmul.mubr.f32.gmra.mrb[0].mxu0 %v122
    %v333 = vpop.f32.mrb[0].mxu0
    %v334 = vadd.f32 0.0, %v333
    %v335 = vpop.f32.mrb[0].mxu0
    %336 = vmatprep.mubr.f32.mxu0 0.0
    %337 = vmatmul.mubr.f32.gmra.mrb[0].mxu0 %v125
    %v338 = vpop.f32.mrb[0].mxu0
    %v339 = vadd.f32 0.0, %v338
    %v340 = vpop.f32.mrb[0].mxu0
    %341 = vmatprep.mubr.f32.mxu0 0.0
    %342 = vmatmul.mubr.f32.gmra.mrb[0].mxu0 %v128
    %v343 = vpop.f32.mrb[0].mxu0
    %v344 = vadd.f32 0.0, %v343
    %v345 = vpop.f32.mrb[0].mxu0
    %346 = vmatprep.mubr.f32.mxu0 0.0
    %347 = vmatmul.mubr.f32.gmra.mrb[0].mxu0 %v131
    %v348 = vpop.f32.mrb[0].mxu0
    %v349 = vadd.f32 0.0, %v348
    %v350 = vpop.f32.mrb[0].mxu0
    %351 = vmatprep.mubr.f32.mxu0 0.0
    %352 = vmatmul.mubr.f32.gmra.mrb[0].mxu0 %v134
    %v353 = vpop.f32.mrb[0].mxu0
    %v354 = vadd.f32 0.0, %v353
    %v355 = vpop.f32.mrb[0].mxu0
    %356 = vmatprep.mubr.f32.mxu0 0.0
    %357 = vmatmul.mubr.f32.gmra.mrb[0].mxu0 %v137
    %v358 = vpop.f32.mrb[0].mxu0
    %v359 = vadd.f32 0.0, %v358
    %v360 = vpop.f32.mrb[0].mxu0
    %361 = vmatprep.mubr.f32.mxu0 0.0
    %362 = vmatmul.mubr.f32.gmra.mrb[0].mxu0 %v140
    %v363 = vpop.f32.mrb[0].mxu0
    %v364 = vadd.f32 0.0, %v363
    %v365 = vpop.f32.mrb[0].mxu0
    %366 = vmatprep.mubr.f32.mxu0 0.0
    %367 = vmatmul.mubr.f32.gmra.mrb[0].mxu0 %v143
    %v368 = vpop.f32.mrb[0].mxu0
    %v369 = vadd.f32 0.0, %v368
    %v370 = vpop.f32.mrb[0].mxu0
    %371 = vmatprep.mubr.f32.mxu0 0.0
    %372 = vmatmul.mubr.f32.gmra.mrb[0].mxu0 %v146
    %v373 = vpop.f32.mrb[0].mxu0
    %v374 = vadd.f32 0.0, %v373
    %v375 = vpop.f32.mrb[0].mxu0
    %376 = vdwg.mxu0
    %v377 = vlaneseq
    %v378 = vshrl.u32 %v377, 7
    %v379 = vadd.s32 %v378, 8
    %v380 = vadd.s32 %v378, 16
    %v381 = vadd.s32 %v378, 24
    %v382 = vadd.s32 %v378, 32
    %v383 = vadd.s32 %v378, 40
    %v384 = vadd.s32 %v378, 48
    %v385 = vadd.s32 %v378, 56
    %v386 = vadd.s32 %v378, 64
    %v387 = vadd.s32 %v378, 72
    %v388 = vadd.s32 %v378, 80
    %v389 = vadd.s32 %v378, 88
    %v390 = vadd.s32 %v378, 96
    %v391 = vadd.s32 %v378, 104
    %v392 = vadd.s32 %v378, 112
    %v393 = vadd.s32 %v378, 120
    %v394 = vadd.s32 %v378, 128
    %v395 = vadd.s32 %v378, 136
    %v396 = vadd.s32 %v378, 144
    %v397 = vadd.s32 %v378, 152
    %v398 = vadd.s32 %v378, 160
    %v399 = vadd.s32 %v378, 168
    %v400 = vadd.s32 %v378, 176
    %v401 = vadd.s32 %v378, 184
    %v402 = vadd.s32 %v378, 192
    %v403 = vadd.s32 %v378, 200
    %v404 = vadd.s32 %v378, 208
    %v405 = vadd.s32 %v378, 216
    %v406 = vadd.s32 %v378, 224
    %v407 = vadd.s32 %v378, 232
    %v408 = vadd.s32 %v378, 240
    %v409 = vadd.s32 %v378, 248
    %vm410 = vcmp.lt.s32.totalorder %v378, 0
    %v411 = vsub.s32 0, %v378
    %v412 = vsel %vm410, %v411, %v378
    %v413 = vshrl.u32 %v412, 3
    %v414 = vand.u32 %v412, 7
    %v415 = vsub.s32 0, %v414
    %v416 = vsel %vm410, %v415, %v414
    %vm417 = vcmp.lt.s32.totalorder %v379, 0
    %v418 = vsub.s32 0, %v379
    %v419 = vsel %vm417, %v418, %v379
    %v420 = vshrl.u32 %v419, 3
    %v421 = vand.u32 %v419, 7
    %v422 = vsub.s32 0, %v421
    %v423 = vsel %vm417, %v422, %v421
    %vm424 = vcmp.lt.s32.totalorder %v380, 0
    %v425 = vsub.s32 0, %v380
    %v426 = vsel %vm424, %v425, %v380
    %v427 = vshrl.u32 %v426, 3
    %v428 = vand.u32 %v426, 7
    %v429 = vsub.s32 0, %v428
    %v430 = vsel %vm424, %v429, %v428
    %vm431 = vcmp.lt.s32.totalorder %v381, 0
    %v432 = vsub.s32 0, %v381
    %v433 = vsel %vm431, %v432, %v381
    %v434 = vshrl.u32 %v433, 3
    %v435 = vand.u32 %v433, 7
    %v436 = vsub.s32 0, %v435
    %v437 = vsel %vm431, %v436, %v435
    %vm438 = vcmp.lt.s32.totalorder %v382, 0
    %v439 = vsub.s32 0, %v382
    %v440 = vsel %vm438, %v439, %v382
    %v441 = vshrl.u32 %v440, 3
    %v442 = vand.u32 %v440, 7
    %v443 = vsub.s32 0, %v442
    %v444 = vsel %vm438, %v443, %v442
    %vm445 = vcmp.lt.s32.totalorder %v383, 0
    %v446 = vsub.s32 0, %v383
    %v447 = vsel %vm445, %v446, %v383
    %v448 = vshrl.u32 %v447, 3
    %v449 = vand.u32 %v447, 7
    %v450 = vsub.s32 0, %v449
    %v451 = vsel %vm445, %v450, %v449
    %vm452 = vcmp.lt.s32.totalorder %v384, 0
    %v453 = vsub.s32 0, %v384
    %v454 = vsel %vm452, %v453, %v384
    %v455 = vshrl.u32 %v454, 3
    %v456 = vand.u32 %v454, 7
    %v457 = vsub.s32 0, %v456
    %v458 = vsel %vm452, %v457, %v456
    %vm459 = vcmp.lt.s32.totalorder %v385, 0
    %v460 = vsub.s32 0, %v385
    %v461 = vsel %vm459, %v460, %v385
    %v462 = vshrl.u32 %v461, 3
    %v463 = vand.u32 %v461, 7
    %v464 = vsub.s32 0, %v463
    %v465 = vsel %vm459, %v464, %v463
    %vm466 = vcmp.lt.s32.totalorder %v386, 0
    %v467 = vsub.s32 0, %v386
    %v468 = vsel %vm466, %v467, %v386
    %v469 = vshrl.u32 %v468, 3
    %v470 = vand.u32 %v468, 7
    %v471 = vsub.s32 0, %v470
    %v472 = vsel %vm466, %v471, %v470
    %vm473 = vcmp.lt.s32.totalorder %v387, 0
    %v474 = vsub.s32 0, %v387
    %v475 = vsel %vm473, %v474, %v387
    %v476 = vshrl.u32 %v475, 3
    %v477 = vand.u32 %v475, 7
    %v478 = vsub.s32 0, %v477
    %v479 = vsel %vm473, %v478, %v477
    %vm480 = vcmp.lt.s32.totalorder %v388, 0
    %v481 = vsub.s32 0, %v388
    %v482 = vsel %vm480, %v481, %v388
    %v483 = vshrl.u32 %v482, 3
    %v484 = vand.u32 %v482, 7
    %v485 = vsub.s32 0, %v484
    %v486 = vsel %vm480, %v485, %v484
    %vm487 = vcmp.lt.s32.totalorder %v389, 0
    %v488 = vsub.s32 0, %v389
    %v489 = vsel %vm487, %v488, %v389
    %v490 = vshrl.u32 %v489, 3
    %v491 = vand.u32 %v489, 7
    %v492 = vsub.s32 0, %v491
    %v493 = vsel %vm487, %v492, %v491
    %vm494 = vcmp.lt.s32.totalorder %v390, 0
    %v495 = vsub.s32 0, %v390
    %v496 = vsel %vm494, %v495, %v390
    %v497 = vshrl.u32 %v496, 3
    %v498 = vand.u32 %v496, 7
    %v499 = vsub.s32 0, %v498
    %v500 = vsel %vm494, %v499, %v498
    %vm501 = vcmp.lt.s32.totalorder %v391, 0
    %v502 = vsub.s32 0, %v391
    %v503 = vsel %vm501, %v502, %v391
    %v504 = vshrl.u32 %v503, 3
    %v505 = vand.u32 %v503, 7
    %v506 = vsub.s32 0, %v505
    %v507 = vsel %vm501, %v506, %v505
    %vm508 = vcmp.lt.s32.totalorder %v392, 0
    %v509 = vsub.s32 0, %v392
    %v510 = vsel %vm508, %v509, %v392
    %v511 = vshrl.u32 %v510, 3
    %v512 = vand.u32 %v510, 7
    %v513 = vsub.s32 0, %v512
    %v514 = vsel %vm508, %v513, %v512
    %vm515 = vcmp.lt.s32.totalorder %v393, 0
    %v516 = vsub.s32 0, %v393
    %v517 = vsel %vm515, %v516, %v393
    %v518 = vshrl.u32 %v517, 3
    %v519 = vand.u32 %v517, 7
    %v520 = vsub.s32 0, %v519
    %v521 = vsel %vm515, %v520, %v519
    %vm522 = vcmp.lt.s32.totalorder %v394, 0
    %v523 = vsub.s32 0, %v394
    %v524 = vsel %vm522, %v523, %v394
    %v525 = vshrl.u32 %v524, 3
    %v526 = vand.u32 %v524, 7
    %v527 = vsub.s32 0, %v526
    %v528 = vsel %vm522, %v527, %v526
    %vm529 = vcmp.lt.s32.totalorder %v395, 0
    %v530 = vsub.s32 0, %v395
    %v531 = vsel %vm529, %v530, %v395
    %v532 = vshrl.u32 %v531, 3
    %v533 = vand.u32 %v531, 7
    %v534 = vsub.s32 0, %v533
    %v535 = vsel %vm529, %v534, %v533
    %vm536 = vcmp.lt.s32.totalorder %v396, 0
    %v537 = vsub.s32 0, %v396
    %v538 = vsel %vm536, %v537, %v396
    %v539 = vshrl.u32 %v538, 3
    %v540 = vand.u32 %v538, 7
    %v541 = vsub.s32 0, %v540
    %v542 = vsel %vm536, %v541, %v540
    %vm543 = vcmp.lt.s32.totalorder %v397, 0
    %v544 = vsub.s32 0, %v397
    %v545 = vsel %vm543, %v544, %v397
    %v546 = vshrl.u32 %v545, 3
    %v547 = vand.u32 %v545, 7
    %v548 = vsub.s32 0, %v547
    %v549 = vsel %vm543, %v548, %v547
    %vm550 = vcmp.lt.s32.totalorder %v398, 0
    %v551 = vsub.s32 0, %v398
    %v552 = vsel %vm550, %v551, %v398
    %v553 = vshrl.u32 %v552, 3
    %v554 = vand.u32 %v552, 7
    %v555 = vsub.s32 0, %v554
    %v556 = vsel %vm550, %v555, %v554
    %vm557 = vcmp.lt.s32.totalorder %v399, 0
    %v558 = vsub.s32 0, %v399
    %v559 = vsel %vm557, %v558, %v399
    %v560 = vshrl.u32 %v559, 3
    %v561 = vand.u32 %v559, 7
    %v562 = vsub.s32 0, %v561
    %v563 = vsel %vm557, %v562, %v561
    %vm564 = vcmp.lt.s32.totalorder %v400, 0
    %v565 = vsub.s32 0, %v400
    %v566 = vsel %vm564, %v565, %v400
    %v567 = vshrl.u32 %v566, 3
    %v568 = vand.u32 %v566, 7
    %v569 = vsub.s32 0, %v568
    %v570 = vsel %vm564, %v569, %v568
    %vm571 = vcmp.lt.s32.totalorder %v401, 0
    %v572 = vsub.s32 0, %v401
    %v573 = vsel %vm571, %v572, %v401
    %v574 = vshrl.u32 %v573, 3
    %v575 = vand.u32 %v573, 7
    %v576 = vsub.s32 0, %v575
    %v577 = vsel %vm571, %v576, %v575
    %vm578 = vcmp.lt.s32.totalorder %v402, 0
    %v579 = vsub.s32 0, %v402
    %v580 = vsel %vm578, %v579, %v402
    %v581 = vshrl.u32 %v580, 3
    %v582 = vand.u32 %v580, 7
    %v583 = vsub.s32 0, %v582
    %v584 = vsel %vm578, %v583, %v582
    %vm585 = vcmp.lt.s32.totalorder %v403, 0
    %v586 = vsub.s32 0, %v403
    %v587 = vsel %vm585, %v586, %v403
    %v588 = vshrl.u32 %v587, 3
    %v589 = vand.u32 %v587, 7
    %v590 = vsub.s32 0, %v589
    %v591 = vsel %vm585, %v590, %v589
    %vm592 = vcmp.lt.s32.totalorder %v404, 0
    %v593 = vsub.s32 0, %v404
    %v594 = vsel %vm592, %v593, %v404
    %v595 = vshrl.u32 %v594, 3
    %v596 = vand.u32 %v594, 7
    %v597 = vsub.s32 0, %v596
    %v598 = vsel %vm592, %v597, %v596
    %vm599 = vcmp.lt.s32.totalorder %v405, 0
    %v600 = vsub.s32 0, %v405
    %v601 = vsel %vm599, %v600, %v405
    %v602 = vshrl.u32 %v601, 3
    %v603 = vand.u32 %v601, 7
    %v604 = vsub.s32 0, %v603
    %v605 = vsel %vm599, %v604, %v603
    %vm606 = vcmp.lt.s32.totalorder %v406, 0
    %v607 = vsub.s32 0, %v406
    %v608 = vsel %vm606, %v607, %v406
    %v609 = vshrl.u32 %v608, 3
    %v610 = vand.u32 %v608, 7
    %v611 = vsub.s32 0, %v610
    %v612 = vsel %vm606, %v611, %v610
    %vm613 = vcmp.lt.s32.totalorder %v407, 0
    %v614 = vsub.s32 0, %v407
    %v615 = vsel %vm613, %v614, %v407
    %v616 = vshrl.u32 %v615, 3
    %v617 = vand.u32 %v615, 7
    %v618 = vsub.s32 0, %v617
    %v619 = vsel %vm613, %v618, %v617
    %vm620 = vcmp.lt.s32.totalorder %v408, 0
    %v621 = vsub.s32 0, %v408
    %v622 = vsel %vm620, %v621, %v408
    %v623 = vshrl.u32 %v622, 3
    %v624 = vand.u32 %v622, 7
    %v625 = vsub.s32 0, %v624
    %v626 = vsel %vm620, %v625, %v624
    %vm627 = vcmp.lt.s32.totalorder %v409, 0
    %v628 = vsub.s32 0, %v409
    %v629 = vsel %vm627, %v628, %v409
    %v630 = vshrl.u32 %v629, 3
    %v631 = vand.u32 %v629, 7
    %v632 = vsub.s32 0, %v631
    %v633 = vsel %vm627, %v632, %v631
    %vm634 = vcmp.lt.s32.totalorder %v416, 3
    %vm635 = vcmp.lt.s32.totalorder %v423, 3
    %vm636 = vcmp.lt.s32.totalorder %v430, 3
    %vm637 = vcmp.lt.s32.totalorder %v437, 3
    %vm638 = vcmp.lt.s32.totalorder %v444, 3
    %vm639 = vcmp.lt.s32.totalorder %v451, 3
    %vm640 = vcmp.lt.s32.totalorder %v458, 3
    %vm641 = vcmp.lt.s32.totalorder %v465, 3
    %vm642 = vcmp.lt.s32.totalorder %v472, 3
    %vm643 = vcmp.lt.s32.totalorder %v479, 3
    %vm644 = vcmp.lt.s32.totalorder %v486, 3
    %vm645 = vcmp.lt.s32.totalorder %v493, 3
    %vm646 = vcmp.lt.s32.totalorder %v500, 3
    %vm647 = vcmp.lt.s32.totalorder %v507, 3
    %vm648 = vcmp.lt.s32.totalorder %v514, 3
    %vm649 = vcmp.lt.s32.totalorder %v521, 3
    %vm650 = vcmp.lt.s32.totalorder %v528, 3
    %vm651 = vcmp.lt.s32.totalorder %v535, 3
    %vm652 = vcmp.lt.s32.totalorder %v542, 3
    %vm653 = vcmp.lt.s32.totalorder %v549, 3
    %vm654 = vcmp.lt.s32.totalorder %v556, 3
    %vm655 = vcmp.lt.s32.totalorder %v563, 3
    %vm656 = vcmp.lt.s32.totalorder %v570, 3
    %vm657 = vcmp.lt.s32.totalorder %v577, 3
    %vm658 = vcmp.lt.s32.totalorder %v584, 3
    %vm659 = vcmp.lt.s32.totalorder %v591, 3
    %vm660 = vcmp.lt.s32.totalorder %v598, 3
    %vm661 = vcmp.lt.s32.totalorder %v605, 3
    %vm662 = vcmp.lt.s32.totalorder %v612, 3
    %vm663 = vcmp.lt.s32.totalorder %v619, 3
    %vm664 = vcmp.lt.s32.totalorder %v626, 3
    %vm665 = vcmp.lt.s32.totalorder %v633, 3
    %v666 = vsel %vm634, 1, 0
    %v667 = vsel %vm635, 1, 0
    %v668 = vsel %vm636, 1, 0
    %v669 = vsel %vm637, 1, 0
    %v670 = vsel %vm638, 1, 0
    %v671 = vsel %vm639, 1, 0
    %v672 = vsel %vm640, 1, 0
    %v673 = vsel %vm641, 1, 0
    %v674 = vsel %vm642, 1, 0
    %v675 = vsel %vm643, 1, 0
    %v676 = vsel %vm644, 1, 0
    %v677 = vsel %vm645, 1, 0
    %v678 = vsel %vm646, 1, 0
    %v679 = vsel %vm647, 1, 0
    %v680 = vsel %vm648, 1, 0
    %v681 = vsel %vm649, 1, 0
    %v682 = vsel %vm650, 1, 0
    %v683 = vsel %vm651, 1, 0
    %v684 = vsel %vm652, 1, 0
    %v685 = vsel %vm653, 1, 0
    %v686 = vsel %vm654, 1, 0
    %v687 = vsel %vm655, 1, 0
    %v688 = vsel %vm656, 1, 0
    %v689 = vsel %vm657, 1, 0
    %v690 = vsel %vm658, 1, 0
    %v691 = vsel %vm659, 1, 0
    %v692 = vsel %vm660, 1, 0
    %v693 = vsel %vm661, 1, 0
    %v694 = vsel %vm662, 1, 0
    %v695 = vsel %vm663, 1, 0
    %v696 = vsel %vm664, 1, 0
    %v697 = vsel %vm665, 1, 0
    %vm698 = vcmp.eq.s32.totalorder %v666, 1
    %vm699 = vcmp.eq.s32.totalorder %v667, 1
    %vm700 = vcmp.eq.s32.totalorder %v668, 1
    %vm701 = vcmp.eq.s32.totalorder %v669, 1
    %vm702 = vcmp.eq.s32.totalorder %v670, 1
    %vm703 = vcmp.eq.s32.totalorder %v671, 1
    %vm704 = vcmp.eq.s32.totalorder %v672, 1
    %vm705 = vcmp.eq.s32.totalorder %v673, 1
    %vm706 = vcmp.eq.s32.totalorder %v674, 1
    %vm707 = vcmp.eq.s32.totalorder %v675, 1
    %vm708 = vcmp.eq.s32.totalorder %v676, 1
    %vm709 = vcmp.eq.s32.totalorder %v677, 1
    %vm710 = vcmp.eq.s32.totalorder %v678, 1
    %vm711 = vcmp.eq.s32.totalorder %v679, 1
    %vm712 = vcmp.eq.s32.totalorder %v680, 1
    %vm713 = vcmp.eq.s32.totalorder %v681, 1
    %vm714 = vcmp.eq.s32.totalorder %v682, 1
    %vm715 = vcmp.eq.s32.totalorder %v683, 1
    %vm716 = vcmp.eq.s32.totalorder %v684, 1
    %vm717 = vcmp.eq.s32.totalorder %v685, 1
    %vm718 = vcmp.eq.s32.totalorder %v686, 1
    %vm719 = vcmp.eq.s32.totalorder %v687, 1
    %vm720 = vcmp.eq.s32.totalorder %v688, 1
    %vm721 = vcmp.eq.s32.totalorder %v689, 1
    %vm722 = vcmp.eq.s32.totalorder %v690, 1
    %vm723 = vcmp.eq.s32.totalorder %v691, 1
    %vm724 = vcmp.eq.s32.totalorder %v692, 1
    %vm725 = vcmp.eq.s32.totalorder %v693, 1
    %vm726 = vcmp.eq.s32.totalorder %v694, 1
    %vm727 = vcmp.eq.s32.totalorder %v695, 1
    %vm728 = vcmp.eq.s32.totalorder %v696, 1
    %vm729 = vcmp.eq.s32.totalorder %v697, 1
    %v730 = vsel %vm698, %v219, -inf
    %v731 = vsel %vm699, %v224, -inf
    %v732 = vsel %vm700, %v229, -inf
    %v733 = vsel %vm701, %v234, -inf
    %v734 = vsel %vm702, %v239, -inf
    %v735 = vsel %vm703, %v244, -inf
    %v736 = vsel %vm704, %v249, -inf
    %v737 = vsel %vm705, %v254, -inf
    %v738 = vsel %vm706, %v259, -inf
    %v739 = vsel %vm707, %v264, -inf
    %v740 = vsel %vm708, %v269, -inf
    %v741 = vsel %vm709, %v274, -inf
    %v742 = vsel %vm710, %v279, -inf
    %v743 = vsel %vm711, %v284, -inf
    %v744 = vsel %vm712, %v289, -inf
    %v745 = vsel %vm713, %v294, -inf
    %v746 = vsel %vm714, %v299, -inf
    %v747 = vsel %vm715, %v304, -inf
    %v748 = vsel %vm716, %v309, -inf
    %v749 = vsel %vm717, %v314, -inf
    %v750 = vsel %vm718, %v319, -inf
    %v751 = vsel %vm719, %v324, -inf
    %v752 = vsel %vm720, %v329, -inf
    %v753 = vsel %vm721, %v334, -inf
    %v754 = vsel %vm722, %v339, -inf
    %v755 = vsel %vm723, %v344, -inf
    %v756 = vsel %vm724, %v349, -inf
    %v757 = vsel %vm725, %v354, -inf
    %v758 = vsel %vm726, %v359, -inf
    %v759 = vsel %vm727, %v364, -inf
    %v760 = vsel %vm728, %v369, -inf
    %v761 = vsel %vm729, %v374, -inf
    %v762 = vrot.slane %v730, 4
    %v763 = vmax.f32 %v730, %v762
    %v764 = vrot.slane %v763, 2
    %v765 = vmax.f32 %v763, %v764
    %v766 = vrot.slane %v765, 1
    %v767 = vmax.f32 %v765, %v766
    %v768 = vrot.slane %v731, 4
    %v769 = vmax.f32 %v731, %v768
    %v770 = vrot.slane %v769, 2
    %v771 = vmax.f32 %v769, %v770
    %v772 = vrot.slane %v771, 1
    %v773 = vmax.f32 %v771, %v772
    %v774 = vrot.slane %v732, 4
    %v775 = vmax.f32 %v732, %v774
    %v776 = vrot.slane %v775, 2
    %v777 = vmax.f32 %v775, %v776
    %v778 = vrot.slane %v777, 1
    %v779 = vmax.f32 %v777, %v778
    %v780 = vrot.slane %v733, 4
    %v781 = vmax.f32 %v733, %v780
    %v782 = vrot.slane %v781, 2
    %v783 = vmax.f32 %v781, %v782
    %v784 = vrot.slane %v783, 1
    %v785 = vmax.f32 %v783, %v784
    %v786 = vrot.slane %v734, 4
    %v787 = vmax.f32 %v734, %v786
    %v788 = vrot.slane %v787, 2
    %v789 = vmax.f32 %v787, %v788
    %v790 = vrot.slane %v789, 1
    %v791 = vmax.f32 %v789, %v790
    %v792 = vrot.slane %v735, 4
    %v793 = vmax.f32 %v735, %v792
    %v794 = vrot.slane %v793, 2
    %v795 = vmax.f32 %v793, %v794
    %v796 = vrot.slane %v795, 1
    %v797 = vmax.f32 %v795, %v796
    %v798 = vrot.slane %v736, 4
    %v799 = vmax.f32 %v736, %v798
    %v800 = vrot.slane %v799, 2
    %v801 = vmax.f32 %v799, %v800
    %v802 = vrot.slane %v801, 1
    %v803 = vmax.f32 %v801, %v802
    %v804 = vrot.slane %v737, 4
    %v805 = vmax.f32 %v737, %v804
    %v806 = vrot.slane %v805, 2
    %v807 = vmax.f32 %v805, %v806
    %v808 = vrot.slane %v807, 1
    %v809 = vmax.f32 %v807, %v808
    %v810 = vrot.slane %v738, 4
    %v811 = vmax.f32 %v738, %v810
    %v812 = vrot.slane %v811, 2
    %v813 = vmax.f32 %v811, %v812
    %v814 = vrot.slane %v813, 1
    %v815 = vmax.f32 %v813, %v814
    %v816 = vrot.slane %v739, 4
    %v817 = vmax.f32 %v739, %v816
    %v818 = vrot.slane %v817, 2
    %v819 = vmax.f32 %v817, %v818
    %v820 = vrot.slane %v819, 1
    %v821 = vmax.f32 %v819, %v820
    %v822 = vrot.slane %v740, 4
    %v823 = vmax.f32 %v740, %v822
    %v824 = vrot.slane %v823, 2
    %v825 = vmax.f32 %v823, %v824
    %v826 = vrot.slane %v825, 1
    %v827 = vmax.f32 %v825, %v826
    %v828 = vrot.slane %v741, 4
    %v829 = vmax.f32 %v741, %v828
    %v830 = vrot.slane %v829, 2
    %v831 = vmax.f32 %v829, %v830
    %v832 = vrot.slane %v831, 1
    %v833 = vmax.f32 %v831, %v832
    %v834 = vrot.slane %v742, 4
    %v835 = vmax.f32 %v742, %v834
    %v836 = vrot.slane %v835, 2
    %v837 = vmax.f32 %v835, %v836
    %v838 = vrot.slane %v837, 1
    %v839 = vmax.f32 %v837, %v838
    %v840 = vrot.slane %v743, 4
    %v841 = vmax.f32 %v743, %v840
    %v842 = vrot.slane %v841, 2
    %v843 = vmax.f32 %v841, %v842
    %v844 = vrot.slane %v843, 1
    %v845 = vmax.f32 %v843, %v844
    %v846 = vrot.slane %v744, 4
    %v847 = vmax.f32 %v744, %v846
    %v848 = vrot.slane %v847, 2
    %v849 = vmax.f32 %v847, %v848
    %v850 = vrot.slane %v849, 1
    %v851 = vmax.f32 %v849, %v850
    %v852 = vrot.slane %v745, 4
    %v853 = vmax.f32 %v745, %v852
    %v854 = vrot.slane %v853, 2
    %v855 = vmax.f32 %v853, %v854
    %v856 = vrot.slane %v855, 1
    %v857 = vmax.f32 %v855, %v856
    %v858 = vrot.slane %v746, 4
    %v859 = vmax.f32 %v746, %v858
    %v860 = vrot.slane %v859, 2
    %v861 = vmax.f32 %v859, %v860
    %v862 = vrot.slane %v861, 1
    %v863 = vmax.f32 %v861, %v862
    %v864 = vrot.slane %v747, 4
    %v865 = vmax.f32 %v747, %v864
    %v866 = vrot.slane %v865, 2
    %v867 = vmax.f32 %v865, %v866
    %v868 = vrot.slane %v867, 1
    %v869 = vmax.f32 %v867, %v868
    %v870 = vrot.slane %v748, 4
    %v871 = vmax.f32 %v748, %v870
    %v872 = vrot.slane %v871, 2
    %v873 = vmax.f32 %v871, %v872
    %v874 = vrot.slane %v873, 1
    %v875 = vmax.f32 %v873, %v874
    %v876 = vrot.slane %v749, 4
    %v877 = vmax.f32 %v749, %v876
    %v878 = vrot.slane %v877, 2
    %v879 = vmax.f32 %v877, %v878
    %v880 = vrot.slane %v879, 1
    %v881 = vmax.f32 %v879, %v880
    %v882 = vrot.slane %v750, 4
    %v883 = vmax.f32 %v750, %v882
    %v884 = vrot.slane %v883, 2
    %v885 = vmax.f32 %v883, %v884
    %v886 = vrot.slane %v885, 1
    %v887 = vmax.f32 %v885, %v886
    %v888 = vrot.slane %v751, 4
    %v889 = vmax.f32 %v751, %v888
    %v890 = vrot.slane %v889, 2
    %v891 = vmax.f32 %v889, %v890
    %v892 = vrot.slane %v891, 1
    %v893 = vmax.f32 %v891, %v892
    %v894 = vrot.slane %v752, 4
    %v895 = vmax.f32 %v752, %v894
    %v896 = vrot.slane %v895, 2
    %v897 = vmax.f32 %v895, %v896
    %v898 = vrot.slane %v897, 1
    %v899 = vmax.f32 %v897, %v898
    %v900 = vrot.slane %v753, 4
    %v901 = vmax.f32 %v753, %v900
    %v902 = vrot.slane %v901, 2
    %v903 = vmax.f32 %v901, %v902
    %v904 = vrot.slane %v903, 1
    %v905 = vmax.f32 %v903, %v904
    %v906 = vrot.slane %v754, 4
    %v907 = vmax.f32 %v754, %v906
    %v908 = vrot.slane %v907, 2
    %v909 = vmax.f32 %v907, %v908
    %v910 = vrot.slane %v909, 1
    %v911 = vmax.f32 %v909, %v910
    %v912 = vrot.slane %v755, 4
    %v913 = vmax.f32 %v755, %v912
    %v914 = vrot.slane %v913, 2
    %v915 = vmax.f32 %v913, %v914
    %v916 = vrot.slane %v915, 1
    %v917 = vmax.f32 %v915, %v916
    %v918 = vrot.slane %v756, 4
    %v919 = vmax.f32 %v756, %v918
    %v920 = vrot.slane %v919, 2
    %v921 = vmax.f32 %v919, %v920
    %v922 = vrot.slane %v921, 1
    %v923 = vmax.f32 %v921, %v922
    %v924 = vrot.slane %v757, 4
    %v925 = vmax.f32 %v757, %v924
    %v926 = vrot.slane %v925, 2
    %v927 = vmax.f32 %v925, %v926
    %v928 = vrot.slane %v927, 1
    %v929 = vmax.f32 %v927, %v928
    %v930 = vrot.slane %v758, 4
    %v931 = vmax.f32 %v758, %v930
    %v932 = vrot.slane %v931, 2
    %v933 = vmax.f32 %v931, %v932
    %v934 = vrot.slane %v933, 1
    %v935 = vmax.f32 %v933, %v934
    %v936 = vrot.slane %v759, 4
    %v937 = vmax.f32 %v759, %v936
    %v938 = vrot.slane %v937, 2
    %v939 = vmax.f32 %v937, %v938
    %v940 = vrot.slane %v939, 1
    %v941 = vmax.f32 %v939, %v940
    %v942 = vrot.slane %v760, 4
    %v943 = vmax.f32 %v760, %v942
    %v944 = vrot.slane %v943, 2
    %v945 = vmax.f32 %v943, %v944
    %v946 = vrot.slane %v945, 1
    %v947 = vmax.f32 %v945, %v946
    %v948 = vrot.slane %v761, 4
    %v949 = vmax.f32 %v761, %v948
    %v950 = vrot.slane %v949, 2
    %v951 = vmax.f32 %v949, %v950
    %v952 = vrot.slane %v951, 1
    %v953 = vmax.f32 %v951, %v952
    %v954 = vld [vmem:[%s2] sm:$0x1]
    %v956 = vlaneseq
    %v957 = vshrl.u32 %v956, 7
    %v958 = vsub.s32 0, %v957
    %v959 = vrot.slane %v954, %v958
    %v961 = vadd.f32 %v767, %v959
    %v962 = vadd.f32 %v773, %v959
    %v963 = vadd.f32 %v779, %v959
    %v964 = vadd.f32 %v785, %v959
    %v965 = vadd.f32 %v791, %v959
    %v966 = vadd.f32 %v797, %v959
    %v967 = vadd.f32 %v803, %v959
    %v968 = vadd.f32 %v809, %v959
    %v969 = vadd.f32 %v815, %v959
    %v970 = vadd.f32 %v821, %v959
    %v971 = vadd.f32 %v827, %v959
    %v972 = vadd.f32 %v833, %v959
    %v973 = vadd.f32 %v839, %v959
    %v974 = vadd.f32 %v845, %v959
    %v975 = vadd.f32 %v851, %v959
    %v976 = vadd.f32 %v857, %v959
    %v977 = vadd.f32 %v863, %v959
    %v978 = vadd.f32 %v869, %v959
    %v979 = vadd.f32 %v875, %v959
    %v980 = vadd.f32 %v881, %v959
    %v981 = vadd.f32 %v887, %v959
    %v982 = vadd.f32 %v893, %v959
    %v983 = vadd.f32 %v899, %v959
    %v984 = vadd.f32 %v905, %v959
    %v985 = vadd.f32 %v911, %v959
    %v986 = vadd.f32 %v917, %v959
    %v987 = vadd.f32 %v923, %v959
    %v988 = vadd.f32 %v929, %v959
    %v989 = vadd.f32 %v935, %v959
    %v990 = vadd.f32 %v941, %v959
    %v991 = vadd.f32 %v947, %v959
    %v992 = vadd.f32 %v953, %v959
    %v1025 = vrot.slane %v962, 7
    %vm1026 = vcmask 1041409
    %v1027 = vsel %vm1026, %v1025, %v961
    %v1028 = vrot.slane %v963, 6
    %vm1029 = vcmask 1042434
    %v1030 = vsel %vm1029, %v1028, %v1027
    %v1031 = vrot.slane %v964, 5
    %vm1032 = vcmask 1043459
    %v1033 = vsel %vm1032, %v1031, %v1030
    %v1034 = vrot.slane %v965, 4
    %vm1035 = vcmask 1044484
    %v1036 = vsel %vm1035, %v1034, %v1033
    %v1037 = vrot.slane %v966, 3
    %vm1038 = vcmask 1045509
    %v1039 = vsel %vm1038, %v1037, %v1036
    %v1040 = vrot.slane %v967, 2
    %vm1041 = vcmask 1046534
    %v1042 = vsel %vm1041, %v1040, %v1039
    %v1043 = vrot.slane %v968, 1
    %vm1044 = vcmask 1047559
    %v1045 = vsel %vm1044, %v1043, %v1042
    %v1046 = vrot.slane %v970, 7
    %v1047 = vsel %vm1026, %v1046, %v969
    %v1048 = vrot.slane %v971, 6
    %v1049 = vsel %vm1029, %v1048, %v1047
    %v1050 = vrot.slane %v972, 5
    %v1051 = vsel %vm1032, %v1050, %v1049
    %v1052 = vrot.slane %v973, 4
    %v1053 = vsel %vm1035, %v1052, %v1051
    %v1054 = vrot.slane %v974, 3
    %v1055 = vsel %vm1038, %v1054, %v1053
    %v1056 = vrot.slane %v975, 2
    %v1057 = vsel %vm1041, %v1056, %v1055
    %v1058 = vrot.slane %v976, 1
    %v1059 = vsel %vm1044, %v1058, %v1057
    %v1060 = vrot.slane %v978, 7
    %v1061 = vsel %vm1026, %v1060, %v977
    %v1062 = vrot.slane %v979, 6
    %v1063 = vsel %vm1029, %v1062, %v1061
    %v1064 = vrot.slane %v980, 5
    %v1065 = vsel %vm1032, %v1064, %v1063
    %v1066 = vrot.slane %v981, 4
    %v1067 = vsel %vm1035, %v1066, %v1065
    %v1068 = vrot.slane %v982, 3
    %v1069 = vsel %vm1038, %v1068, %v1067
    %v1070 = vrot.slane %v983, 2
    %v1071 = vsel %vm1041, %v1070, %v1069
    %v1072 = vrot.slane %v984, 1
    %v1073 = vsel %vm1044, %v1072, %v1071
    %v1074 = vrot.slane %v986, 7
    %v1075 = vsel %vm1026, %v1074, %v985
    %v1076 = vrot.slane %v987, 6
    %v1077 = vsel %vm1029, %v1076, %v1075
    %v1078 = vrot.slane %v988, 5
    %v1079 = vsel %vm1032, %v1078, %v1077
    %v1080 = vrot.slane %v989, 4
    %v1081 = vsel %vm1035, %v1080, %v1079
    %v1082 = vrot.slane %v990, 3
    %v1083 = vsel %vm1038, %v1082, %v1081
    %v1084 = vrot.slane %v991, 2
    %v1085 = vsel %vm1041, %v1084, %v1083
    %v1086 = vrot.slane %v992, 1
    %v1087 = vsel %vm1044, %v1086, %v1085
    %1092 = vst [vmem:[#allocation2] sm:$0xff] %v1045
    %1093 = vst [vmem:[#allocation2 + $0x8] sm:$0xff] %v1059
    %1094 = vst [vmem:[#allocation2 + $0x10] sm:$0xff] %v1073
    %1095 = vst [vmem:[#allocation2 + $0x18] sm:$0xff] %v1087
    // Predicated region
    $region14: #{tpu_custom_call.1} parent=1 // pred_check
      _
    $region15: #{tpu_custom_call.1} parent=1 // pred_check_branch
      %1097 = sbr.rel (0) target = $region17
    $region16: #{tpu_custom_call.1} parent=1 // pred_region
      %s1099 = ssub.s32 512, 512
      %1100 = vsyncadd [#allocation3], %s1099
      %s1101 = sshll.u32 [#allocation2], 4
      %s1102 = int_to_ptr.vmem [resolvable:$true] %s1101
      %1107 = dma.vmem_to_hbm [thread:$0]  %s1102, 512, %s3, [#allocation3], 128, 128, 8
    $region17: #{tpu_custom_call.1} parent=1 // pred_fallthru
      _
    // Predicated region
    $region18: #{tpu_custom_call.1} parent=1 // pred_check
      _
    $region19: #{tpu_custom_call.1} parent=1 // pred_check_branch
      %1109 = sbr.rel (0) target = $region21
    $region20: #{tpu_custom_call.1} parent=1 // pred_region
      %1110 = dma.done [#allocation3], 512
    $region21: #{tpu_custom_call.1} parent=1 // pred_fallthru
      _
    %1111 = vsyncpa [#allocation3], 1

</llo_original>
